<compile_context>
chip_gen: v7x
topology: tpu7x:2x2x1
jax: 0.10.0
libtpu: 0.0.40
codegen_flags: <defaults>
</compile_context>

<pallas_src>
import functools

import jax
import jax.numpy as jnp
from jax.experimental import pallas as pl
from jax.experimental.pallas import tpu as pltpu


def _residual_block_kernel(x_ref, m_ref, w1_ref, b1_ref, w2_ref, b2_ref,
                           o_ref, *, W, L):
    # x_ref : (Cp, L)        L = nb * HWp lanes (nb images packed along lanes)
    # m_ref : (9, L)         0/1 tap-validity masks (per-image, tiled)
    # w*_ref: (3, Cp, 3*Cp)  row slab g: row = cout, col = kw*Cp + cin
    # b*_ref: (Cp, 1)
    # o_ref : (Cp, L)
    x = x_ref[...].astype(jnp.float32)

    def conv3x3(inp, w_ref, b_ref):
        # im2col in registers, one kernel-row (K = 3*Cp) at a time: 3 taps are
        # lane-rolls of the activation times a precomputed edge mask, stacked
        # along sublanes, then one MXU matmul per row, accumulated in f32.
        acc = None
        k = 0
        for g, dh in enumerate((-1, 0, 1)):
            taps = []
            for dw in (-1, 0, 1):
                d = dh * W + dw
                t = inp if d == 0 else pltpu.roll(inp, shift=(-d) % L, axis=1)
                if k != 4:                                   # centre tap: no mask
                    t = t * m_ref[pl.ds(k, 1), :]
                taps.append(t)
                k += 1
            patch = jnp.concatenate(taps, axis=0)            # (3*Cp, L)
            part = jnp.dot(w_ref[g], patch,
                           preferred_element_type=jnp.float32)
            acc = part if acc is None else acc + part
        return acc + b_ref[...]                              # bias broadcasts over lanes

    h1 = jnp.maximum(x, 0.0)                                 # relu1
    c1 = conv3x3(h1, w1_ref, b1_ref)                         # conv1
    h2 = jnp.maximum(c1, 0.0)                                # relu2
    c2 = conv3x3(h2, w2_ref, b2_ref)                         # conv2
    o_ref[...] = (c2 + x).astype(o_ref.dtype)                # residual (pre-relu x)


def _plan_batching(B, HWp, target_lanes=2048):
    """Images packed per grid step (nb) and grid extent."""
    nb = max(1, target_lanes // HWp)
    nb = min(nb, B)
    grid = pl.cdiv(B, nb)
    if grid == 1 and B >= 2:          # keep >= 2 steps so v7x megacore gets both TCs
        grid = 2
        nb = pl.cdiv(B, 2)
    return nb, grid


def _tap_masks(H, W, HWp, nb):
    """(9, nb*HWp) f32 masks; tap k = kh*3+kw reads x[h+kh-1, w+kw-1]."""
    idx = jnp.arange(HWp, dtype=jnp.int32)
    h = idx // W
    w = idx - h * W
    in_img = idx < H * W
    rows = []
    for dh in (-1, 0, 1):
        for dw in (-1, 0, 1):
            m = in_img
            if dh < 0:
                m = m & (h >= -dh)
            elif dh > 0:
                m = m & (h < H - dh)
            if dw < 0:
                m = m & (w >= -dw)
            elif dw > 0:
                m = m & (w < W - dw)
            rows.append(m)
    masks = jnp.stack(rows).astype(jnp.float32)              # (9, HWp)
    return jnp.tile(masks, (1, nb))                          # (9, nb*HWp)


def interpretable_residual_block(x_nchw, w1, b1, w2, b2):
    """x_nchw: (B, C, H, W); w*: (C, C, 3, 3) torch OIHW layout; b*: (C,)."""
    B, C, H, W = x_nchw.shape
    HW = H * W
    Cp = ((C + 7) // 8) * 8                    # sublane-aligned channels
    HWp = ((HW + 127) // 128) * 128            # lane-aligned per-image spatial
    nb, grid = _plan_batching(B, HWp)
    L = nb * HWp                               # lanes per grid step
    Bp = nb * grid

    # (B, C, H, W) -> (Cp, Bp*HWp): channels on sublanes, packed batch*spatial
    # on lanes.  Pure layout plumbing (zero-pad + transpose) in the wrapper so
    # every in-kernel op and store is lane-dense.
    x = x_nchw.reshape(B, C, HW)
    x = jnp.pad(x, ((0, Bp - B), (0, Cp - C), (0, HWp - HW)))
    x = jnp.transpose(x, (1, 0, 2)).reshape(Cp, Bp * HWp)

    def prep_w(wt):
        # OIHW -> (kh, cout, kw, cin), zero-pad channels, -> (3, Cp, 3*Cp)
        wq = jnp.transpose(wt.astype(jnp.float32), (2, 0, 3, 1))
        wq = jnp.pad(wq, ((0, 0), (0, Cp - C), (0, 0), (0, Cp - C)))
        return wq.reshape(3, Cp, 3 * Cp)

    def prep_b(b):
        return jnp.pad(b.astype(jnp.float32), (0, Cp - C)).reshape(Cp, 1)

    w1m, w2m = prep_w(w1), prep_w(w2)
    b1m, b2m = prep_b(b1), prep_b(b2)
    masks = _tap_masks(H, W, HWp, nb)

    # Advisory hint so XLA schedules this small custom call tightly.
    flops = 2 * 2 * Cp * (9 * Cp) * (Bp * HWp)               # 2 convs, 2*M*K*N
    bytes_accessed = 4 * (2 * Cp * Bp * HWp + 9 * L
                          + 2 * (3 * Cp * 3 * Cp) + 2 * Cp)

    kernel = functools.partial(_residual_block_kernel, W=W, L=L)
    out = pl.pallas_call(
        kernel,
        out_shape=jax.ShapeDtypeStruct((Cp, Bp * HWp), x_nchw.dtype),
        grid_spec=pltpu.PrefetchScalarGridSpec(
            num_scalar_prefetch=0,
            grid=(grid,),                                    # parallel over batch groups
            in_specs=[
                pl.BlockSpec((Cp, L), lambda g: (0, g)),
                # masks / weights / biases: constant index_map -> VMEM-resident
                pl.BlockSpec((9, L), lambda g: (0, 0)),
                pl.BlockSpec((3, Cp, 3 * Cp), lambda g: (0, 0, 0)),
                pl.BlockSpec((Cp, 1), lambda g: (0, 0)),
                pl.BlockSpec((3, Cp, 3 * Cp), lambda g: (0, 0, 0)),
                pl.BlockSpec((Cp, 1), lambda g: (0, 0)),
            ],
            out_specs=pl.BlockSpec((Cp, L), lambda g: (0, g)),
        ),
        compiler_params=pltpu.CompilerParams(
            dimension_semantics=("parallel",)),
        cost_estimate=pl.CostEstimate(
            flops=int(flops), transcendentals=0,
            bytes_accessed=int(bytes_accessed)),
    )(x, masks, w1m, b1m, w2m, b2m)

    out = out.reshape(Cp, Bp, HWp).transpose(1, 0, 2)        # (Bp, Cp, HWp)
    return out[:B, :C, :HW].reshape(B, C, H, W)


def _reference(x, w1, b1, w2, b2):
    """Pure-JAX reference matching the PyTorch forward (NCHW / OIHW)."""
    def conv(inp, w, b):
        y = jax.lax.conv_general_dilated(
            inp, w, window_strides=(1, 1), padding="SAME",
            dimension_numbers=("NCHW", "OIHW", "NCHW"))
        return y + b[None, :, None, None]

    h = jax.nn.relu(x)
    h = conv(h, w1, b1)
    h = jax.nn.relu(h)
    h = conv(h, w2, b2)
    return h + x


def _run_check(B, C, H, W):
    key = jax.random.PRNGKey(0)
    kx, kw1, kb1, kw2, kb2 = jax.random.split(key, 5)
    x = jax.random.normal(kx, (B, C, H, W), dtype=jnp.float32)
    w1 = jax.random.normal(kw1, (C, C, 3, 3), dtype=jnp.float32) * 0.2
    b1 = jax.random.normal(kb1, (C,), dtype=jnp.float32) * 0.1
    w2 = jax.random.normal(kw2, (C, C, 3, 3), dtype=jnp.float32) * 0.2
    b2 = jax.random.normal(kb2, (C,), dtype=jnp.float32) * 0.1

    out = interpretable_residual_block(x, w1, b1, w2, b2)
    out = jax.block_until_ready(out)
    ref = _reference(x, w1, b1, w2, b2)
    assert out.shape == (B, C, H, W)
    err = jnp.max(jnp.abs(out - ref))
    assert jnp.allclose(out, ref, atol=1e-4, rtol=1e-4), f"max abs err = {err}"


if __name__ == "__main__":
    # Primary shape from the module spec (nb=1 per step, grid=2).
    _run_check(2, 4, 16, 16)
    # Larger batch exercises the lane-packing path (nb=8 images/step, grid=2).
    _run_check(16, 4, 16, 16)
    print("KERNEL_OK")
</pallas_src>

<mosaic_0001>
module attributes {stable_mosaic.version = 11 : i64} {
  func.func @_residual_block_kernel(%arg0: i32, %arg1: memref<8x256xf32, #tpu.memory_space<vmem>>, %arg2: memref<9x256xf32, #tpu.memory_space<vmem>>, %arg3: memref<3x8x24xf32, #tpu.memory_space<vmem>>, %arg4: memref<8x1xf32, #tpu.memory_space<vmem>>, %arg5: memref<3x8x24xf32, #tpu.memory_space<vmem>>, %arg6: memref<8x1xf32, #tpu.memory_space<vmem>>, %arg7: memref<8x256xf32, #tpu.memory_space<vmem>>) attributes {dimension_semantics = [#tpu.dimension_semantics<parallel>], iteration_bounds = array<i64: 2>, scalar_prefetch = 0 : i64, scratch_operands = 0 : i64, tpu.core_type = #tpu.core_type<tc>, window_params = [{transform_indices = @transform_0, window_bounds = array<i64: 8, 256>}, {pipeline_mode = #tpu.pipeline_mode<synchronous>, transform_indices = @transform_1, window_bounds = array<i64: 9, 256>}, {pipeline_mode = #tpu.pipeline_mode<synchronous>, transform_indices = @transform_2, window_bounds = array<i64: 3, 8, 24>}, {pipeline_mode = #tpu.pipeline_mode<synchronous>, transform_indices = @transform_3, window_bounds = array<i64: 8, 1>}, {pipeline_mode = #tpu.pipeline_mode<synchronous>, transform_indices = @transform_4, window_bounds = array<i64: 3, 8, 24>}, {pipeline_mode = #tpu.pipeline_mode<synchronous>, transform_indices = @transform_5, window_bounds = array<i64: 8, 1>}, {transform_indices = @transform_6, window_bounds = array<i64: 8, 256>}]} {
    %c0 = arith.constant 0 : index
    %c0_0 = arith.constant 0 : index
    %0 = vector.load %arg1[%c0, %c0_0] : memref<8x256xf32, #tpu.memory_space<vmem>>, vector<8x256xf32>
    %cst = arith.constant 0.000000e+00 : f32
    %1 = vector.broadcast %cst : f32 to vector<8x256xf32>
    %2 = arith.maximumf %0, %1 : vector<8x256xf32>
    %c17_i32 = arith.constant 17 : i32
    %3 = tpu.dynamic_rotate %2 by %c17_i32 dim 1 : vector<8x256xf32>, i32 -> vector<8x256xf32>
    %c0_1 = arith.constant 0 : index
    %c0_2 = arith.constant 0 : index
    %4 = vector.load %arg2[%c0_1, %c0_2] : memref<9x256xf32, #tpu.memory_space<vmem>>, vector<1x256xf32>
    %5 = vector.broadcast %4 : vector<1x256xf32> to vector<8x256xf32>
    %6 = arith.mulf %3, %5 : vector<8x256xf32>
    %c16_i32 = arith.constant 16 : i32
    %7 = tpu.dynamic_rotate %2 by %c16_i32 dim 1 : vector<8x256xf32>, i32 -> vector<8x256xf32>
    %c1 = arith.constant 1 : index
    %c0_3 = arith.constant 0 : index
    %8 = vector.load %arg2[%c1, %c0_3] : memref<9x256xf32, #tpu.memory_space<vmem>>, vector<1x256xf32>
    %9 = vector.broadcast %8 : vector<1x256xf32> to vector<8x256xf32>
    %10 = arith.mulf %7, %9 : vector<8x256xf32>
    %c15_i32 = arith.constant 15 : i32
    %11 = tpu.dynamic_rotate %2 by %c15_i32 dim 1 : vector<8x256xf32>, i32 -> vector<8x256xf32>
    %c2 = arith.constant 2 : index
    %c0_4 = arith.constant 0 : index
    %12 = vector.load %arg2[%c2, %c0_4] : memref<9x256xf32, #tpu.memory_space<vmem>>, vector<1x256xf32>
    %13 = vector.broadcast %12 : vector<1x256xf32> to vector<8x256xf32>
    %14 = arith.mulf %11, %13 : vector<8x256xf32>
    %15 = tpu.concatenate %6, %10, %14 in 0 : vector<8x256xf32>, vector<8x256xf32>, vector<8x256xf32> -> vector<24x256xf32>
    %c0_5 = arith.constant 0 : index
    %c0_6 = arith.constant 0 : index
    %c0_7 = arith.constant 0 : index
    %16 = vector.load %arg3[%c0_5, %c0_6, %c0_7] : memref<3x8x24xf32, #tpu.memory_space<vmem>>, vector<1x8x24xf32>
    %17 = vector.shape_cast %16 : vector<1x8x24xf32> to vector<8x24xf32>
    %cst_8 = arith.constant dense<0.000000e+00> : vector<8x256xf32>
    %18 = tpu.matmul %17, %15, %cst_8 {dimension_numbers = #tpu.dot_dimension_numbers<[1], [0], [0], [1], [0, 0, 1, 1], [], []>} : vector<8x24xf32>, vector<24x256xf32>, vector<8x256xf32> -> vector<8x256xf32>
    %c1_i32 = arith.constant 1 : i32
    %19 = tpu.dynamic_rotate %2 by %c1_i32 dim 1 : vector<8x256xf32>, i32 -> vector<8x256xf32>
    %c3 = arith.constant 3 : index
    %c0_9 = arith.constant 0 : index
    %20 = vector.load %arg2[%c3, %c0_9] : memref<9x256xf32, #tpu.memory_space<vmem>>, vector<1x256xf32>
    %21 = vector.broadcast %20 : vector<1x256xf32> to vector<8x256xf32>
    %22 = arith.mulf %19, %21 : vector<8x256xf32>
    %c255_i32 = arith.constant 255 : i32
    %23 = tpu.dynamic_rotate %2 by %c255_i32 dim 1 : vector<8x256xf32>, i32 -> vector<8x256xf32>
    %c5 = arith.constant 5 : index
    %c0_10 = arith.constant 0 : index
    %24 = vector.load %arg2[%c5, %c0_10] : memref<9x256xf32, #tpu.memory_space<vmem>>, vector<1x256xf32>
    %25 = vector.broadcast %24 : vector<1x256xf32> to vector<8x256xf32>
    %26 = arith.mulf %23, %25 : vector<8x256xf32>
    %27 = tpu.concatenate %22, %2, %26 in 0 : vector<8x256xf32>, vector<8x256xf32>, vector<8x256xf32> -> vector<24x256xf32>
    %c1_11 = arith.constant 1 : index
    %c0_12 = arith.constant 0 : index
    %c0_13 = arith.constant 0 : index
    %28 = vector.load %arg3[%c1_11, %c0_12, %c0_13] : memref<3x8x24xf32, #tpu.memory_space<vmem>>, vector<1x8x24xf32>
    %29 = vector.shape_cast %28 : vector<1x8x24xf32> to vector<8x24xf32>
    %cst_14 = arith.constant dense<0.000000e+00> : vector<8x256xf32>
    %30 = tpu.matmul %29, %27, %cst_14 {dimension_numbers = #tpu.dot_dimension_numbers<[1], [0], [0], [1], [0, 0, 1, 1], [], []>} : vector<8x24xf32>, vector<24x256xf32>, vector<8x256xf32> -> vector<8x256xf32>
    %31 = arith.addf %18, %30 : vector<8x256xf32>
    %c241_i32 = arith.constant 241 : i32
    %32 = tpu.dynamic_rotate %2 by %c241_i32 dim 1 : vector<8x256xf32>, i32 -> vector<8x256xf32>
    %c6 = arith.constant 6 : index
    %c0_15 = arith.constant 0 : index
    %33 = vector.load %arg2[%c6, %c0_15] : memref<9x256xf32, #tpu.memory_space<vmem>>, vector<1x256xf32>
    %34 = vector.broadcast %33 : vector<1x256xf32> to vector<8x256xf32>
    %35 = arith.mulf %32, %34 : vector<8x256xf32>
    %c240_i32 = arith.constant 240 : i32
    %36 = tpu.dynamic_rotate %2 by %c240_i32 dim 1 : vector<8x256xf32>, i32 -> vector<8x256xf32>
    %c7 = arith.constant 7 : index
    %c0_16 = arith.constant 0 : index
    %37 = vector.load %arg2[%c7, %c0_16] : memref<9x256xf32, #tpu.memory_space<vmem>>, vector<1x256xf32>
    %38 = vector.broadcast %37 : vector<1x256xf32> to vector<8x256xf32>
    %39 = arith.mulf %36, %38 : vector<8x256xf32>
    %c239_i32 = arith.constant 239 : i32
    %40 = tpu.dynamic_rotate %2 by %c239_i32 dim 1 : vector<8x256xf32>, i32 -> vector<8x256xf32>
    %c8 = arith.constant 8 : index
    %c0_17 = arith.constant 0 : index
    %41 = vector.load %arg2[%c8, %c0_17] : memref<9x256xf32, #tpu.memory_space<vmem>>, vector<1x256xf32>
    %42 = vector.broadcast %41 : vector<1x256xf32> to vector<8x256xf32>
    %43 = arith.mulf %40, %42 : vector<8x256xf32>
    %44 = tpu.concatenate %35, %39, %43 in 0 : vector<8x256xf32>, vector<8x256xf32>, vector<8x256xf32> -> vector<24x256xf32>
    %c2_18 = arith.constant 2 : index
    %c0_19 = arith.constant 0 : index
    %c0_20 = arith.constant 0 : index
    %45 = vector.load %arg3[%c2_18, %c0_19, %c0_20] : memref<3x8x24xf32, #tpu.memory_space<vmem>>, vector<1x8x24xf32>
    %46 = vector.shape_cast %45 : vector<1x8x24xf32> to vector<8x24xf32>
    %cst_21 = arith.constant dense<0.000000e+00> : vector<8x256xf32>
    %47 = tpu.matmul %46, %44, %cst_21 {dimension_numbers = #tpu.dot_dimension_numbers<[1], [0], [0], [1], [0, 0, 1, 1], [], []>} : vector<8x24xf32>, vector<24x256xf32>, vector<8x256xf32> -> vector<8x256xf32>
    %48 = arith.addf %31, %47 : vector<8x256xf32>
    %c0_22 = arith.constant 0 : index
    %c0_23 = arith.constant 0 : index
    %49 = vector.load %arg4[%c0_22, %c0_23] : memref<8x1xf32, #tpu.memory_space<vmem>>, vector<8x1xf32>
    %50 = vector.broadcast %49 : vector<8x1xf32> to vector<8x256xf32>
    %51 = arith.addf %48, %50 : vector<8x256xf32>
    %cst_24 = arith.constant 0.000000e+00 : f32
    %52 = vector.broadcast %cst_24 : f32 to vector<8x256xf32>
    %53 = arith.maximumf %51, %52 : vector<8x256xf32>
    %c17_i32_25 = arith.constant 17 : i32
    %54 = tpu.dynamic_rotate %53 by %c17_i32_25 dim 1 : vector<8x256xf32>, i32 -> vector<8x256xf32>
    %c0_26 = arith.constant 0 : index
    %c0_27 = arith.constant 0 : index
    %55 = vector.load %arg2[%c0_26, %c0_27] : memref<9x256xf32, #tpu.memory_space<vmem>>, vector<1x256xf32>
    %56 = vector.broadcast %55 : vector<1x256xf32> to vector<8x256xf32>
    %57 = arith.mulf %54, %56 : vector<8x256xf32>
    %c16_i32_28 = arith.constant 16 : i32
    %58 = tpu.dynamic_rotate %53 by %c16_i32_28 dim 1 : vector<8x256xf32>, i32 -> vector<8x256xf32>
    %c1_29 = arith.constant 1 : index
    %c0_30 = arith.constant 0 : index
    %59 = vector.load %arg2[%c1_29, %c0_30] : memref<9x256xf32, #tpu.memory_space<vmem>>, vector<1x256xf32>
    %60 = vector.broadcast %59 : vector<1x256xf32> to vector<8x256xf32>
    %61 = arith.mulf %58, %60 : vector<8x256xf32>
    %c15_i32_31 = arith.constant 15 : i32
    %62 = tpu.dynamic_rotate %53 by %c15_i32_31 dim 1 : vector<8x256xf32>, i32 -> vector<8x256xf32>
    %c2_32 = arith.constant 2 : index
    %c0_33 = arith.constant 0 : index
    %63 = vector.load %arg2[%c2_32, %c0_33] : memref<9x256xf32, #tpu.memory_space<vmem>>, vector<1x256xf32>
    %64 = vector.broadcast %63 : vector<1x256xf32> to vector<8x256xf32>
    %65 = arith.mulf %62, %64 : vector<8x256xf32>
    %66 = tpu.concatenate %57, %61, %65 in 0 : vector<8x256xf32>, vector<8x256xf32>, vector<8x256xf32> -> vector<24x256xf32>
    %c0_34 = arith.constant 0 : index
    %c0_35 = arith.constant 0 : index
    %c0_36 = arith.constant 0 : index
    %67 = vector.load %arg5[%c0_34, %c0_35, %c0_36] : memref<3x8x24xf32, #tpu.memory_space<vmem>>, vector<1x8x24xf32>
    %68 = vector.shape_cast %67 : vector<1x8x24xf32> to vector<8x24xf32>
    %cst_37 = arith.constant dense<0.000000e+00> : vector<8x256xf32>
    %69 = tpu.matmul %68, %66, %cst_37 {dimension_numbers = #tpu.dot_dimension_numbers<[1], [0], [0], [1], [0, 0, 1, 1], [], []>} : vector<8x24xf32>, vector<24x256xf32>, vector<8x256xf32> -> vector<8x256xf32>
    %c1_i32_38 = arith.constant 1 : i32
    %70 = tpu.dynamic_rotate %53 by %c1_i32_38 dim 1 : vector<8x256xf32>, i32 -> vector<8x256xf32>
    %c3_39 = arith.constant 3 : index
    %c0_40 = arith.constant 0 : index
    %71 = vector.load %arg2[%c3_39, %c0_40] : memref<9x256xf32, #tpu.memory_space<vmem>>, vector<1x256xf32>
    %72 = vector.broadcast %71 : vector<1x256xf32> to vector<8x256xf32>
    %73 = arith.mulf %70, %72 : vector<8x256xf32>
    %c255_i32_41 = arith.constant 255 : i32
    %74 = tpu.dynamic_rotate %53 by %c255_i32_41 dim 1 : vector<8x256xf32>, i32 -> vector<8x256xf32>
    %c5_42 = arith.constant 5 : index
    %c0_43 = arith.constant 0 : index
    %75 = vector.load %arg2[%c5_42, %c0_43] : memref<9x256xf32, #tpu.memory_space<vmem>>, vector<1x256xf32>
    %76 = vector.broadcast %75 : vector<1x256xf32> to vector<8x256xf32>
    %77 = arith.mulf %74, %76 : vector<8x256xf32>
    %78 = tpu.concatenate %73, %53, %77 in 0 : vector<8x256xf32>, vector<8x256xf32>, vector<8x256xf32> -> vector<24x256xf32>
    %c1_44 = arith.constant 1 : index
    %c0_45 = arith.constant 0 : index
    %c0_46 = arith.constant 0 : index
    %79 = vector.load %arg5[%c1_44, %c0_45, %c0_46] : memref<3x8x24xf32, #tpu.memory_space<vmem>>, vector<1x8x24xf32>
    %80 = vector.shape_cast %79 : vector<1x8x24xf32> to vector<8x24xf32>
    %cst_47 = arith.constant dense<0.000000e+00> : vector<8x256xf32>
    %81 = tpu.matmul %80, %78, %cst_47 {dimension_numbers = #tpu.dot_dimension_numbers<[1], [0], [0], [1], [0, 0, 1, 1], [], []>} : vector<8x24xf32>, vector<24x256xf32>, vector<8x256xf32> -> vector<8x256xf32>
    %82 = arith.addf %69, %81 : vector<8x256xf32>
    %c241_i32_48 = arith.constant 241 : i32
    %83 = tpu.dynamic_rotate %53 by %c241_i32_48 dim 1 : vector<8x256xf32>, i32 -> vector<8x256xf32>
    %c6_49 = arith.constant 6 : index
    %c0_50 = arith.constant 0 : index
    %84 = vector.load %arg2[%c6_49, %c0_50] : memref<9x256xf32, #tpu.memory_space<vmem>>, vector<1x256xf32>
    %85 = vector.broadcast %84 : vector<1x256xf32> to vector<8x256xf32>
    %86 = arith.mulf %83, %85 : vector<8x256xf32>
    %c240_i32_51 = arith.constant 240 : i32
    %87 = tpu.dynamic_rotate %53 by %c240_i32_51 dim 1 : vector<8x256xf32>, i32 -> vector<8x256xf32>
    %c7_52 = arith.constant 7 : index
    %c0_53 = arith.constant 0 : index
    %88 = vector.load %arg2[%c7_52, %c0_53] : memref<9x256xf32, #tpu.memory_space<vmem>>, vector<1x256xf32>
    %89 = vector.broadcast %88 : vector<1x256xf32> to vector<8x256xf32>
    %90 = arith.mulf %87, %89 : vector<8x256xf32>
    %c239_i32_54 = arith.constant 239 : i32
    %91 = tpu.dynamic_rotate %53 by %c239_i32_54 dim 1 : vector<8x256xf32>, i32 -> vector<8x256xf32>
    %c8_55 = arith.constant 8 : index
    %c0_56 = arith.constant 0 : index
    %92 = vector.load %arg2[%c8_55, %c0_56] : memref<9x256xf32, #tpu.memory_space<vmem>>, vector<1x256xf32>
    %93 = vector.broadcast %92 : vector<1x256xf32> to vector<8x256xf32>
    %94 = arith.mulf %91, %93 : vector<8x256xf32>
    %95 = tpu.concatenate %86, %90, %94 in 0 : vector<8x256xf32>, vector<8x256xf32>, vector<8x256xf32> -> vector<24x256xf32>
    %c2_57 = arith.constant 2 : index
    %c0_58 = arith.constant 0 : index
    %c0_59 = arith.constant 0 : index
    %96 = vector.load %arg5[%c2_57, %c0_58, %c0_59] : memref<3x8x24xf32, #tpu.memory_space<vmem>>, vector<1x8x24xf32>
    %97 = vector.shape_cast %96 : vector<1x8x24xf32> to vector<8x24xf32>
    %cst_60 = arith.constant dense<0.000000e+00> : vector<8x256xf32>
    %98 = tpu.matmul %97, %95, %cst_60 {dimension_numbers = #tpu.dot_dimension_numbers<[1], [0], [0], [1], [0, 0, 1, 1], [], []>} : vector<8x24xf32>, vector<24x256xf32>, vector<8x256xf32> -> vector<8x256xf32>
    %99 = arith.addf %82, %98 : vector<8x256xf32>
    %c0_61 = arith.constant 0 : index
    %c0_62 = arith.constant 0 : index
    %100 = vector.load %arg6[%c0_61, %c0_62] : memref<8x1xf32, #tpu.memory_space<vmem>>, vector<8x1xf32>
    %101 = vector.broadcast %100 : vector<8x1xf32> to vector<8x256xf32>
    %102 = arith.addf %99, %101 : vector<8x256xf32>
    %103 = arith.addf %102, %0 : vector<8x256xf32>
    %c0_63 = arith.constant 0 : index
    %c0_64 = arith.constant 0 : index
    %104 = vector.load %arg7[%c0_63, %c0_64] : memref<8x256xf32, #tpu.memory_space<vmem>>, vector<8x256xf32>
    tpu.vector_store %arg7[%c0_63, %c0_64], %103 {strides = array<i32>} : memref<8x256xf32, #tpu.memory_space<vmem>>, vector<8x256xf32>,
    return
  }
  func.func @transform_0(%arg0: i32) -> (i32, i32) {
    %c0_i32 = arith.constant 0 : i32
    %c0_i32_0 = arith.constant 0 : i32
    return %c0_i32, %arg0 : i32, i32
  }
  func.func @transform_1(%arg0: i32) -> (i32, i32) {
    %c0_i32 = arith.constant 0 : i32
    %c0_i32_0 = arith.constant 0 : i32
    %c0_i32_1 = arith.constant 0 : i32
    return %c0_i32, %c0_i32_0 : i32, i32
  }
  func.func @transform_2(%arg0: i32) -> (i32, i32, i32) {
    %c0_i32 = arith.constant 0 : i32
    %c0_i32_0 = arith.constant 0 : i32
    %c0_i32_1 = arith.constant 0 : i32
    %c0_i32_2 = arith.constant 0 : i32
    return %c0_i32, %c0_i32_0, %c0_i32_1 : i32, i32, i32
  }
  func.func @transform_3(%arg0: i32) -> (i32, i32) {
    %c0_i32 = arith.constant 0 : i32
    %c0_i32_0 = arith.constant 0 : i32
    %c0_i32_1 = arith.constant 0 : i32
    return %c0_i32, %c0_i32_0 : i32, i32
  }
  func.func @transform_4(%arg0: i32) -> (i32, i32, i32) {
    %c0_i32 = arith.constant 0 : i32
    %c0_i32_0 = arith.constant 0 : i32
    %c0_i32_1 = arith.constant 0 : i32
    %c0_i32_2 = arith.constant 0 : i32
    return %c0_i32, %c0_i32_0, %c0_i32_1 : i32, i32, i32
  }
  func.func @transform_5(%arg0: i32) -> (i32, i32) {
    %c0_i32 = arith.constant 0 : i32
    %c0_i32_0 = arith.constant 0 : i32
    %c0_i32_1 = arith.constant 0 : i32
    return %c0_i32, %c0_i32_0 : i32, i32
  }
  func.func @transform_6(%arg0: i32) -> (i32, i32) {
    %c0_i32 = arith.constant 0 : i32
    %c0_i32_0 = arith.constant 0 : i32
    return %c0_i32, %arg0 : i32, i32
  }
}

</mosaic_0001>

<llo_original>
// kernel: tpu_custom_call.1
$region0: #{tpu_custom_call.1}
  #allocation0 [shape = 'u32[]', space=smem, size = 0x4, offset = 0x4, fixed_abs, tag = 'smem constant byte address 0x4 - core index']
  #allocation1 [shape = 'u32[144,128]{1,0:T(1,128)}', space=vmem, size = 0x12000, scoped, tag = 'internal scratch']
  %s0 = inlined_call_operand.hbm [shape: f32[8,512], index: 0, kind: input, shape index: {}]
  %s1 = inlined_call_operand.hbm [shape: f32[9,256], index: 1, kind: input, shape index: {}]
  %s2 = inlined_call_operand.vmem [shape: f32[3,8,24], index: 2, kind: input, shape index: {}]
  %s3 = inlined_call_operand.vmem [shape: f32[8,1], index: 3, kind: input, shape index: {}]
  %s4 = inlined_call_operand.hbm [shape: f32[3,8,24], index: 4, kind: input, shape index: {}]
  %s5 = inlined_call_operand.vmem [shape: f32[8,1], index: 5, kind: input, shape index: {}]
  %s6 = inlined_call_operand.hbm [shape: f32[8,512], index: 6, kind: output, shape index: {}]
  %s7 = sld [smem:[#allocation0]]
  $region69: #{tpu_custom_call.1} parent=0
    _
  %s9 = ssub.s32 1, %s7
  %s10 = scalar_select 0, %s9, %s7
  $region1: #{tpu_custom_call.1} parent=0
    #allocation2 [shape = 'u8[16384]{0}', space=vmem, size = 0x4000, scoped, tag = 'input window, operand 0']
    #allocation3 [shape = 's32[2]{0}', space=sflag, size = 0x8, scoped, tag = 'scoped memory for tpu_custom_call.1']
    #allocation4 [shape = 's32[2]{0}', space=sflag, size = 0x8, scoped, tag = 'scoped memory for tpu_custom_call.1']
    #allocation5 [shape = 'u8[16384]{0}', space=vmem, size = 0x4000, scoped, tag = 'input window, operand 1, single buffered']
    #allocation6 [shape = 's32[1]{0}', space=sflag, size = 0x4, scoped, tag = 'scoped memory for tpu_custom_call.1']
    #allocation7 [shape = 'u8[12288]{0}', space=vmem, size = 0x3000, scoped, tag = 'input window, operand 4, single buffered']
    #allocation8 [shape = 'u8[16384]{0}', space=vmem, size = 0x4000, scoped, tag = 'output window, operand 0']
    %11 = vsyncpa [#allocation3], 0
    %s12 = scalar_lea.sflag [#allocation3], 1
    %13 = vsyncpa %s12, 0
    %14 = vsyncpa [#allocation6], 0
    %15 = vsyncpa [#allocation4], 0
    %s16 = scalar_lea.sflag [#allocation4], 1
    %17 = vsyncpa %s16, 0
    loop: start=0, step=1, limit=4
    $region2: #{tpu_custom_call.1} parent=1 // loop_pre_header
      _
    $region3: #{tpu_custom_call.1} parent=1 // loop_header
      %s19 = sphi 0, %s23
      %p20 = scmp.ge.s32.totalorder %s19, 4
      %s29 = sphi 0, %s31
      %s32 = sphi 0, %s29
      %s33 = sphi 0, %s32
      %s49 = sphi 0, %s33
      %s53 = sphi 0, %s53
      %s55 = sphi 0, %s53
      %s56 = sphi 0, %s55
      %s70 = sphi 0, %s56
      %s74 = sphi 0, %s74
      %s76 = sphi 0, %s74
      %s77 = sphi 0, %s76
      %s91 = sphi 0, %s77
      %s95 = sphi 0, %s95
      %s97 = sphi 0, %s95
      %s98 = sphi 0, %s97
      %s112 = sphi 0, %s98
      %s116 = sphi 0, %s116
      %s118 = sphi 0, %s116
      %s119 = sphi 0, %s118
      %s133 = sphi 0, %s119
      %s137 = sphi 0, %s137
      %s139 = sphi 0, %s137
      %s140 = sphi 0, %s139
      %s154 = sphi 0, %s140
      %s160 = sphi 0, %s162
      %s163 = sphi 0, %s160
      %s164 = sphi 0, %s163
      %s180 = sphi 0, %s164
    $region4: #{tpu_custom_call.1} parent=1 // loop_header_branch
      %22 = sbr.rel (%p20) target = $region8
    $region5: #{tpu_custom_call.1} parent=1 // loop_body
      %s24 = ssub.s32 %s19, 1
      %s25 = ssub.s32 %s19, 2
      %s26 = sadd.s32 %s19, 1
      %s27 = ssub.s32 %s19, %s26
      %p28 = scmp.eq.s32.totalorder %s27, 0
      %s30 = sadd.s32 %s29, 1
      %s31 = scalar_select %p28, %s29, %s30
      %p34 = pneg %p28
      %p35 = scmp.eq.s32.totalorder %s19, 1
      %p36 = por %p34, %p35
      %p37 = scmp.ne.s32.totalorder %s29, %s32
      %p38 = scmp.eq.s32.totalorder %s19, 0
      %p39 = por %p37, %p38
      %p40 = scmp.ne.s32.totalorder %s29, %s32
      %p41 = scmp.eq.s32.totalorder %s24, 1
      %p42 = por %p40, %p41
      %p43 = scmp.ne.s32.totalorder %s32, %s33
      %p44 = scmp.eq.s32.totalorder %s24, 0
      %p45 = por %p43, %p44
      %p46 = scmp.ne.s32.totalorder %s32, %s33
      %p47 = scmp.eq.s32.totalorder %s25, 1
      %p48 = por %p46, %p47
      %p50 = scmp.ne.s32.totalorder %s33, %s49
      %p51 = scmp.eq.s32.totalorder %s25, 0
      %p52 = por %p50, %p51
      %s54 = sadd.s32 %s53, 1
      %p57 = scmp.eq.s32.totalorder %s19, 1
      %p58 = scmp.ne.s32.totalorder %s53, %s55
      %p59 = scmp.eq.s32.totalorder %s19, 0
      %p60 = por %p58, %p59
      %p61 = scmp.ne.s32.totalorder %s53, %s55
      %p62 = scmp.eq.s32.totalorder %s24, 1
      %p63 = por %p61, %p62
      %p64 = scmp.ne.s32.totalorder %s55, %s56
      %p65 = scmp.eq.s32.totalorder %s24, 0
      %p66 = por %p64, %p65
      %p67 = scmp.ne.s32.totalorder %s55, %s56
      %p68 = scmp.eq.s32.totalorder %s25, 1
      %p69 = por %p67, %p68
      %p71 = scmp.ne.s32.totalorder %s56, %s70
      %p72 = scmp.eq.s32.totalorder %s25, 0
      %p73 = por %p71, %p72
      %s75 = sadd.s32 %s74, 1
      %p78 = scmp.eq.s32.totalorder %s19, 1
      %p79 = scmp.ne.s32.totalorder %s74, %s76
      %p80 = scmp.eq.s32.totalorder %s19, 0
      %p81 = por %p79, %p80
      %p82 = scmp.ne.s32.totalorder %s74, %s76
      %p83 = scmp.eq.s32.totalorder %s24, 1
      %p84 = por %p82, %p83
      %p85 = scmp.ne.s32.totalorder %s76, %s77
      %p86 = scmp.eq.s32.totalorder %s24, 0
      %p87 = por %p85, %p86
      %p88 = scmp.ne.s32.totalorder %s76, %s77
      %p89 = scmp.eq.s32.totalorder %s25, 1
      %p90 = por %p88, %p89
      %p92 = scmp.ne.s32.totalorder %s77, %s91
      %p93 = scmp.eq.s32.totalorder %s25, 0
      %p94 = por %p92, %p93
      %s96 = sadd.s32 %s95, 1
      %p99 = scmp.eq.s32.totalorder %s19, 1
      %p100 = scmp.ne.s32.totalorder %s95, %s97
      %p101 = scmp.eq.s32.totalorder %s19, 0
      %p102 = por %p100, %p101
      %p103 = scmp.ne.s32.totalorder %s95, %s97
      %p104 = scmp.eq.s32.totalorder %s24, 1
      %p105 = por %p103, %p104
      %p106 = scmp.ne.s32.totalorder %s97, %s98
      %p107 = scmp.eq.s32.totalorder %s24, 0
      %p108 = por %p106, %p107
      %p109 = scmp.ne.s32.totalorder %s97, %s98
      %p110 = scmp.eq.s32.totalorder %s25, 1
      %p111 = por %p109, %p110
      %p113 = scmp.ne.s32.totalorder %s98, %s112
      %p114 = scmp.eq.s32.totalorder %s25, 0
      %p115 = por %p113, %p114
      %s117 = sadd.s32 %s116, 1
      %p120 = scmp.eq.s32.totalorder %s19, 1
      %p121 = scmp.ne.s32.totalorder %s116, %s118
      %p122 = scmp.eq.s32.totalorder %s19, 0
      %p123 = por %p121, %p122
      %p124 = scmp.ne.s32.totalorder %s116, %s118
      %p125 = scmp.eq.s32.totalorder %s24, 1
      %p126 = por %p124, %p125
      %p127 = scmp.ne.s32.totalorder %s118, %s119
      %p128 = scmp.eq.s32.totalorder %s24, 0
      %p129 = por %p127, %p128
      %p130 = scmp.ne.s32.totalorder %s118, %s119
      %p131 = scmp.eq.s32.totalorder %s25, 1
      %p132 = por %p130, %p131
      %p134 = scmp.ne.s32.totalorder %s119, %s133
      %p135 = scmp.eq.s32.totalorder %s25, 0
      %p136 = por %p134, %p135
      %s138 = sadd.s32 %s137, 1
      %p141 = scmp.eq.s32.totalorder %s19, 1
      %p142 = scmp.ne.s32.totalorder %s137, %s139
      %p143 = scmp.eq.s32.totalorder %s19, 0
      %p144 = por %p142, %p143
      %p145 = scmp.ne.s32.totalorder %s137, %s139
      %p146 = scmp.eq.s32.totalorder %s24, 1
      %p147 = por %p145, %p146
      %p148 = scmp.ne.s32.totalorder %s139, %s140
      %p149 = scmp.eq.s32.totalorder %s24, 0
      %p150 = por %p148, %p149
      %p151 = scmp.ne.s32.totalorder %s139, %s140
      %p152 = scmp.eq.s32.totalorder %s25, 1
      %p153 = por %p151, %p152
      %p155 = scmp.ne.s32.totalorder %s140, %s154
      %p156 = scmp.eq.s32.totalorder %s25, 0
      %p157 = por %p155, %p156
      %s158 = ssub.s32 %s19, %s26
      %p159 = scmp.eq.s32.totalorder %s158, 0
      %s161 = sadd.s32 %s160, 1
      %s162 = scalar_select %p159, %s160, %s161
      %p165 = pneg %p159
      %p166 = scmp.eq.s32.totalorder %s19, 1
      %p167 = por %p165, %p166
      %p168 = scmp.ne.s32.totalorder %s160, %s163
      %p169 = scmp.eq.s32.totalorder %s19, 0
      %p170 = por %p168, %p169
      %p171 = scmp.ne.s32.totalorder %s160, %s163
      %p172 = scmp.eq.s32.totalorder %s24, 1
      %p173 = por %p171, %p172
      %p174 = scmp.ne.s32.totalorder %s163, %s164
      %p175 = scmp.eq.s32.totalorder %s24, 0
      %p176 = por %p174, %p175
      %p177 = scmp.ne.s32.totalorder %s163, %s164
      %p178 = scmp.eq.s32.totalorder %s25, 1
      %p179 = por %p177, %p178
      %p181 = scmp.ne.s32.totalorder %s164, %s180
      %p182 = scmp.eq.s32.totalorder %s25, 0
      %p183 = por %p181, %p182
      %p184 = scmp.le.s32.totalorder 1, %s19
      %p185 = scmp.lt.s32.totalorder %s19, 3
      %p186 = pnand %p184, %p185
      %p187 = pneg %p186
      // Predicated region
      $region9: #{tpu_custom_call.1} parent=5 // pred_check
        _
      $region10: #{tpu_custom_call.1} parent=5 // pred_check_branch
        %189 = sbr.rel (%p186) target = $region12
      $region11: #{tpu_custom_call.1} parent=5 // pred_region
        %s190 = ssub.s32 %s19, 1
        // Predicated region
        $region13: #{tpu_custom_call.1} parent=11 // pred_check
          %p191 = pneg %p66
        $region14: #{tpu_custom_call.1} parent=11 // pred_check_branch
          %193 = sbr.rel (%p191) target = $region16
        $region15: #{tpu_custom_call.1} parent=11 // pred_region
          %s195 = ssub.s32 512, 512
          %196 = vsyncadd [#allocation6], %s195
          %s197 = sshll.u32 [#allocation5], 4
          %s198 = int_to_ptr.vmem [resolvable:$true] %s197
          %203 = dma.hbm_to_vmem [thread:$0]  %s1, 512, %s198, [#allocation6], 256, 256, 16
        $region16: #{tpu_custom_call.1} parent=11 // pred_fallthru
          _
        // Predicated region
        $region17: #{tpu_custom_call.1} parent=11 // pred_check
          %p204 = pneg %p87
        $region18: #{tpu_custom_call.1} parent=11 // pred_check_branch
          %206 = sbr.rel (%p204) target = $region20
        $region19: #{tpu_custom_call.1} parent=11 // pred_region
          _
        $region20: #{tpu_custom_call.1} parent=11 // pred_fallthru
          _
        // Predicated region
        $region21: #{tpu_custom_call.1} parent=11 // pred_check
          %p207 = pneg %p108
        $region22: #{tpu_custom_call.1} parent=11 // pred_check_branch
          %209 = sbr.rel (%p207) target = $region24
        $region23: #{tpu_custom_call.1} parent=11 // pred_region
          _
        $region24: #{tpu_custom_call.1} parent=11 // pred_fallthru
          _
        // Predicated region
        $region25: #{tpu_custom_call.1} parent=11 // pred_check
          %p210 = pneg %p129
        $region26: #{tpu_custom_call.1} parent=11 // pred_check_branch
          %212 = sbr.rel (%p210) target = $region28
        $region27: #{tpu_custom_call.1} parent=11 // pred_region
          %s214 = ssub.s32 384, 384
          %215 = vsyncadd [#allocation6], %s214
          %s216 = sshll.u32 [#allocation7], 4
          %s217 = int_to_ptr.vmem [resolvable:$true] %s216
          %222 = dma.hbm_to_vmem [thread:$0]  %s4, 384, %s217, [#allocation6], 128, 128, 8
        $region28: #{tpu_custom_call.1} parent=11 // pred_fallthru
          _
        // Predicated region
        $region29: #{tpu_custom_call.1} parent=11 // pred_check
          %p223 = pneg %p150
        $region30: #{tpu_custom_call.1} parent=11 // pred_check_branch
          %225 = sbr.rel (%p223) target = $region32
        $region31: #{tpu_custom_call.1} parent=11 // pred_region
          _
        $region32: #{tpu_custom_call.1} parent=11 // pred_fallthru
          _
      $region12: #{tpu_custom_call.1} parent=5 // pred_fallthru
        _
      %p226 = scmp.lt.s32.totalorder %s19, 2
      // Predicated region
      $region33: #{tpu_custom_call.1} parent=5 // pred_check
        %p227 = pneg %p226
      $region34: #{tpu_custom_call.1} parent=5 // pred_check_branch
        %229 = sbr.rel (%p227) target = $region36
      $region35: #{tpu_custom_call.1} parent=5 // pred_region
        // Predicated region
        $region37: #{tpu_custom_call.1} parent=35 // pred_check
          %p230 = pneg %p39
        $region38: #{tpu_custom_call.1} parent=35 // pred_check_branch
          %232 = sbr.rel (%p230) target = $region40
        $region39: #{tpu_custom_call.1} parent=35 // pred_region
          %s233 = sand.u32 %s29, 1
          %s234 = scalar_lea.sflag [#allocation3], %s233
          %s235 = sand.u32 %s29, 1
          %s236 = smul.addr %s235, 16
          %s237 = scalar_lea.vmem [#allocation2], %s236
          %s238 = smul.u32 2, %s19
          %s240 = ssub.s32 256, 256
          %241 = vsyncadd %s234, %s240
          %s242 = smul.addr %s238, 128
          %s243 = scalar_lea.hbm %s0, %s242
          %s245 = sshll.u32 %s237, 4
          %s246 = int_to_ptr.vmem [resolvable:$true] %s245
          %248 = dma.hbm_to_vmem [thread:$0]  %s243, 256, %s246, %s234
        $region40: #{tpu_custom_call.1} parent=35 // pred_fallthru
          _
      $region36: #{tpu_custom_call.1} parent=5 // pred_fallthru
        _
      %p249 = scmp.le.s32.totalorder 1, %s19
      %p250 = scmp.lt.s32.totalorder %s19, 3
      %p251 = pnand %p249, %p250
      %p252 = pneg %p251
      // Predicated region
      $region41: #{tpu_custom_call.1} parent=5 // pred_check
        _
      $region42: #{tpu_custom_call.1} parent=5 // pred_check_branch
        %254 = sbr.rel (%p251) target = $region44
      $region43: #{tpu_custom_call.1} parent=5 // pred_region
        %s255 = ssub.s32 %s19, 1
        %s256 = sand.u32 %s32, 1
        %s257 = scalar_lea.sflag [#allocation3], %s256
        %s258 = sand.u32 %s32, 1
        %s259 = smul.addr %s258, 16
        %s260 = scalar_lea.vmem [#allocation2], %s259
        // Predicated region
        $region45: #{tpu_custom_call.1} parent=43 // pred_check
          %p261 = pneg %p45
        $region46: #{tpu_custom_call.1} parent=43 // pred_check_branch
          %263 = sbr.rel (%p261) target = $region48
        $region47: #{tpu_custom_call.1} parent=43 // pred_region
          %264 = dma.done %s257, 256
        $region48: #{tpu_custom_call.1} parent=43 // pred_fallthru
          _
        // Predicated region
        $region49: #{tpu_custom_call.1} parent=43 // pred_check
          %p265 = pneg %p66
        $region50: #{tpu_custom_call.1} parent=43 // pred_check_branch
          %267 = sbr.rel (%p265) target = $region52
        $region51: #{tpu_custom_call.1} parent=43 // pred_region
          %268 = dma.done [#allocation6], 512
        $region52: #{tpu_custom_call.1} parent=43 // pred_fallthru
          _
        // Predicated region
        $region53: #{tpu_custom_call.1} parent=43 // pred_check
          %p269 = pneg %p129
        $region54: #{tpu_custom_call.1} parent=43 // pred_check_branch
          %271 = sbr.rel (%p269) target = $region56
        $region55: #{tpu_custom_call.1} parent=43 // pred_region
          %272 = dma.done [#allocation6], 384
        $region56: #{tpu_custom_call.1} parent=43 // pred_fallthru
          _
        %s273 = sand.u32 %s32, 1
        %s274 = scalar_lea.sflag [#allocation3], %s273
        %s275 = sand.u32 %s32, 1
        %s276 = smul.addr %s275, 16
        %s277 = scalar_lea.vmem [#allocation2], %s276
        %p278 = pneg %p45
        %p279 = pneg %p42
        %p280 = pneg %p66
        %p281 = pneg %p63
        %p282 = pneg %p87
        %p283 = pneg %p84
        %p284 = pneg %p108
        %p285 = pneg %p105
        %p286 = pneg %p129
        %p287 = pneg %p126
        %p288 = pneg %p150
        %p289 = pneg %p147
        %p290 = pneg %p176
        %p291 = pneg %p173
        %s292 = sand.u32 %s163, 1
        %s293 = scalar_lea.sflag [#allocation4], %s292
        %s294 = sand.u32 %s163, 1
        %s295 = smul.addr %s294, 16
        %s296 = scalar_lea.vmem [#allocation8], %s295
        %s297 = smul.u32 2, %s24
        %s298 = smul.u32 2, %s24
        %v299 = vld [vmem:[%s260] sm:$0xff]
        %v300 = vld [vmem:[%s260 + $0x8] sm:$0xff]
        %v301 = vmax.f32 %v299, 0.0
        %v302 = vmax.f32 %v300, 0.0
        %303 = vrot.lane.b32.xlu0 %v301, 17
        %v304 = vpop.permute.xlu0 %303
        %305 = vrot.lane.b32.xlu0 %v302, 17
        %v306 = vpop.permute.xlu0 %305
        %v307 = vlaneseq
        %v308 = vand.u32 %v307, 127
        %vm309 = vcmp.lt.s32.totalorder %v308, 17
        %v310 = vsel %vm309, %v304, %v306
        %v311 = vsel %vm309, %v306, %v304
        %v312 = vld [vmem:[#allocation5] ss:$8 sm:$0x3]
        %v314 = vlaneseq
        %v315 = vshrl.u32 %v314, 7
        %v316 = vsub.s32 0, %v315
        %v317 = vrot.slane %v312, %v316
        %v318 = vlaneseq
        %v319 = vshrl.u32 %v318, 7
        %v320 = vsub.s32 1, %v319
        %v321 = vrot.slane %v312, %v320
        %v324 = vmul.f32 %v311, %v317
        %v325 = vmul.f32 %v310, %v321
        %326 = vrot.lane.b32.xlu0 %v301, 16
        %v327 = vpop.permute.xlu0 %326
        %328 = vrot.lane.b32.xlu0 %v302, 16
        %v329 = vpop.permute.xlu0 %328
        %vm330 = vcmp.lt.s32.totalorder %v308, 16
        %v331 = vsel %vm330, %v327, %v329
        %v332 = vsel %vm330, %v329, %v327
        %s333 = scalar_lea.vmem [#allocation5], 1
        %v334 = vld [vmem:[%s333] ss:$8 sm:$0x3]
        %v336 = vlaneseq
        %v337 = vshrl.u32 %v336, 7
        %v338 = vsub.s32 0, %v337
        %v339 = vrot.slane %v334, %v338
        %v340 = vlaneseq
        %v341 = vshrl.u32 %v340, 7
        %v342 = vsub.s32 1, %v341
        %v343 = vrot.slane %v334, %v342
        %v346 = vmul.f32 %v332, %v339
        %v347 = vmul.f32 %v331, %v343
        %348 = vrot.lane.b32.xlu0 %v301, 15
        %v349 = vpop.permute.xlu0 %348
        %350 = vrot.lane.b32.xlu0 %v302, 15
        %v351 = vpop.permute.xlu0 %350
        %vm352 = vcmp.lt.s32.totalorder %v308, 15
        %v353 = vsel %vm352, %v349, %v351
        %v354 = vsel %vm352, %v351, %v349
        %s355 = scalar_lea.vmem [#allocation5], 2
        %v356 = vld [vmem:[%s355] ss:$8 sm:$0x3]
        %v358 = vlaneseq
        %v359 = vshrl.u32 %v358, 7
        %v360 = vsub.s32 0, %v359
        %v361 = vrot.slane %v356, %v360
        %v362 = vlaneseq
        %v363 = vshrl.u32 %v362, 7
        %v364 = vsub.s32 1, %v363
        %v365 = vrot.slane %v356, %v364
        %v368 = vmul.f32 %v354, %v361
        %v369 = vmul.f32 %v353, %v365
        %v370 = vld [vmem:[%s2] sm:$0xff]
        %371 = vrot.lane.b32.xlu0 %v301, 1
        %v372 = vpop.permute.xlu0 %371
        %373 = vrot.lane.b32.xlu0 %v302, 1
        %v374 = vpop.permute.xlu0 %373
        %vm375 = vcmp.lt.s32.totalorder %v308, 1
        %v376 = vsel %vm375, %v372, %v374
        %v377 = vsel %vm375, %v374, %v372
        %s378 = scalar_lea.vmem [#allocation5], 3
        %v379 = vld [vmem:[%s378] ss:$8 sm:$0x3]
        %v381 = vlaneseq
        %v382 = vshrl.u32 %v381, 7
        %v383 = vsub.s32 0, %v382
        %v384 = vrot.slane %v379, %v383
        %v385 = vlaneseq
        %v386 = vshrl.u32 %v385, 7
        %v387 = vsub.s32 1, %v386
        %v388 = vrot.slane %v379, %v387
        %v391 = vmul.f32 %v377, %v384
        %v392 = vmul.f32 %v376, %v388
        %393 = vrot.lane.b32.xlu0 %v301, 127
        %v394 = vpop.permute.xlu0 %393
        %395 = vrot.lane.b32.xlu0 %v302, 127
        %v396 = vpop.permute.xlu0 %395
        %vm397 = vcmp.lt.s32.totalorder %v308, 127
        %v398 = vsel %vm397, %v394, %v396
        %v399 = vsel %vm397, %v396, %v394
        %s400 = scalar_lea.vmem [#allocation5], 5
        %v401 = vld [vmem:[%s400] ss:$8 sm:$0x3]
        %v403 = vlaneseq
        %v404 = vshrl.u32 %v403, 7
        %v405 = vsub.s32 0, %v404
        %v406 = vrot.slane %v401, %v405
        %v407 = vlaneseq
        %v408 = vshrl.u32 %v407, 7
        %v409 = vsub.s32 1, %v408
        %v410 = vrot.slane %v401, %v409
        %v413 = vmul.f32 %v398, %v406
        %v414 = vmul.f32 %v399, %v410
        %s415 = scalar_lea.vmem %s2, 8
        %v416 = vld [vmem:[%s415] sm:$0xff]
        %vm417 = vcmask 195584
        %v419 = vsel %vm417, %v416, 0
        %421 = vmatprep.subr.mxu0 %v392
        %422 = vmatpush1.msra.mxu0 %v391
        %423 = vmatprep.subr.mxu0 %v302
        %424 = vmatpush1.msra.mxu0 %v301
        %425 = vmatprep.subr.mxu0 %v414
        %426 = vmatpush1.msra.mxu0 %v413
        %427 = vmatprep.subr.mxu0 0.0
        %428 = vmatpush1.msra.mxu0 0.0
        %429 = vmatprep.subr.mxu0 0.0
        %430 = vmatpush1.msra.mxu0 0.0
        %431 = vmatprep.subr.mxu0 0.0
        %432 = vmatpush1.msra.mxu0 0.0
        %433 = vmatprep.subr.mxu0 0.0
        %434 = vmatpush1.msra.mxu0 0.0
        %435 = vmatprep.subr.mxu0 0.0
        %436 = vmatpush1.msra.mxu0 0.0
        %437 = vmatprep.subr.mxu0 0.0
        %438 = vmatpush1.msra.mxu0 0.0
        %439 = vmatprep.subr.mxu0 0.0
        %440 = vmatpush1.msra.mxu0 0.0
        %441 = vmatprep.subr.mxu0 0.0
        %442 = vmatpush1.msra.mxu0 0.0
        %443 = vmatprep.subr.mxu0 0.0
        %444 = vmatpush1.msra.mxu0 0.0
        %445 = vmatprep.subr.mxu0 0.0
        %446 = vmatpush1.msra.mxu0 0.0
        %447 = vmatprep.subr.mxu0 0.0
        %448 = vmatpush1.msra.mxu0 0.0
        %449 = vmatprep.subr.mxu0 0.0
        %450 = vmatpush1.msra.mxu0 0.0
        %451 = vmatprep.subr.mxu0 0.0
        %452 = vmatpush1.msra.mxu0 0.0
        %453 = vmatprep.subr.mxu0 0.0
        %454 = vmatpush1.msra.mxu0 0.0
        %455 = vmatprep.subr.mxu0 0.0
        %456 = vmatpush1.msra.mxu0 0.0
        %457 = vmatprep.subr.mxu0 0.0
        %458 = vmatpush1.msra.mxu0 0.0
        %459 = vmatprep.subr.mxu0 0.0
        %460 = vmatpush1.msra.mxu0 0.0
        %461 = vmatprep.subr.mxu0 0.0
        %462 = vmatpush1.msra.mxu0 0.0
        %463 = vmatprep.subr.mxu0 0.0
        %464 = vmatpush1.msra.mxu0 0.0
        %465 = vmatprep.subr.mxu0 0.0
        %466 = vmatpush1.msra.mxu0 0.0
        %467 = vmatprep.subr.mxu0 0.0
        %468 = vmatpush1.msra.mxu0 0.0
        %469 = vmatprep.subr.mxu0 0.0
        %470 = vmatpush1.msra.mxu0 0.0
        %471 = vmatprep.subr.mxu0 0.0
        %472 = vmatpush1.msra.mxu0 0.0
        %473 = vmatprep.subr.mxu0 0.0
        %474 = vmatpush1.msra.mxu0 0.0
        %475 = vmatprep.subr.mxu0 0.0
        %476 = vmatpush1.msra.mxu0 0.0
        %477 = vmatprep.subr.mxu0 0.0
        %478 = vmatpush1.msra.mxu0 0.0
        %479 = vmatprep.subr.mxu0 0.0
        %480 = vmatpush1.msra.mxu0 0.0
        %481 = vmatprep.subr.mxu0 0.0
        %482 = vmatpush1.msra.mxu0 0.0
        %483 = vmatprep.subr.mxu0 0.0
        %484 = vmatpush1.msra.mxu0 0.0
        %485 = vmatprep.mubr.f32.mxu0 0.0
        %486 = vmatmul.mubr.f32.gmra.mrb[0].mxu0 %v419
        %v487 = vpop.f32.mrb[0].mxu0
        %v488 = vadd.f32 0.0, %v487
        %v489 = vpop.f32.mrb[0].mxu0
        %v490 = vadd.f32 0.0, %v489
        %491 = vdwg.mxu0
        %v493 = vsel %vm417, %v370, 0
        %495 = vmatprep.subr.mxu0 %v325
        %496 = vmatpush1.msra.mxu0 %v324
        %497 = vmatprep.subr.mxu0 %v347
        %498 = vmatpush1.msra.mxu0 %v346
        %499 = vmatprep.subr.mxu0 %v369
        %500 = vmatpush1.msra.mxu0 %v368
        %501 = vmatprep.subr.mxu0 0.0
        %502 = vmatpush1.msra.mxu0 0.0
        %503 = vmatprep.subr.mxu0 0.0
        %504 = vmatpush1.msra.mxu0 0.0
        %505 = vmatprep.subr.mxu0 0.0
        %506 = vmatpush1.msra.mxu0 0.0
        %507 = vmatprep.subr.mxu0 0.0
        %508 = vmatpush1.msra.mxu0 0.0
        %509 = vmatprep.subr.mxu0 0.0
        %510 = vmatpush1.msra.mxu0 0.0
        %511 = vmatprep.subr.mxu0 0.0
        %512 = vmatpush1.msra.mxu0 0.0
        %513 = vmatprep.subr.mxu0 0.0
        %514 = vmatpush1.msra.mxu0 0.0
        %515 = vmatprep.subr.mxu0 0.0
        %516 = vmatpush1.msra.mxu0 0.0
        %517 = vmatprep.subr.mxu0 0.0
        %518 = vmatpush1.msra.mxu0 0.0
        %519 = vmatprep.subr.mxu0 0.0
        %520 = vmatpush1.msra.mxu0 0.0
        %521 = vmatprep.subr.mxu0 0.0
        %522 = vmatpush1.msra.mxu0 0.0
        %523 = vmatprep.subr.mxu0 0.0
        %524 = vmatpush1.msra.mxu0 0.0
        %525 = vmatprep.subr.mxu0 0.0
        %526 = vmatpush1.msra.mxu0 0.0
        %527 = vmatprep.subr.mxu0 0.0
        %528 = vmatpush1.msra.mxu0 0.0
        %529 = vmatprep.subr.mxu0 0.0
        %530 = vmatpush1.msra.mxu0 0.0
        %531 = vmatprep.subr.mxu0 0.0
        %532 = vmatpush1.msra.mxu0 0.0
        %533 = vmatprep.subr.mxu0 0.0
        %534 = vmatpush1.msra.mxu0 0.0
        %535 = vmatprep.subr.mxu0 0.0
        %536 = vmatpush1.msra.mxu0 0.0
        %537 = vmatprep.subr.mxu0 0.0
        %538 = vmatpush1.msra.mxu0 0.0
        %539 = vmatprep.subr.mxu0 0.0
        %540 = vmatpush1.msra.mxu0 0.0
        %541 = vmatprep.subr.mxu0 0.0
        %542 = vmatpush1.msra.mxu0 0.0
        %543 = vmatprep.subr.mxu0 0.0
        %544 = vmatpush1.msra.mxu0 0.0
        %545 = vmatprep.subr.mxu0 0.0
        %546 = vmatpush1.msra.mxu0 0.0
        %547 = vmatprep.subr.mxu0 0.0
        %548 = vmatpush1.msra.mxu0 0.0
        %549 = vmatprep.subr.mxu0 0.0
        %550 = vmatpush1.msra.mxu0 0.0
        %551 = vmatprep.subr.mxu0 0.0
        %552 = vmatpush1.msra.mxu0 0.0
        %553 = vmatprep.subr.mxu0 0.0
        %554 = vmatpush1.msra.mxu0 0.0
        %555 = vmatprep.subr.mxu0 0.0
        %556 = vmatpush1.msra.mxu0 0.0
        %557 = vmatprep.subr.mxu0 0.0
        %558 = vmatpush1.msra.mxu0 0.0
        %559 = vmatprep.mubr.f32.mxu0 0.0
        %560 = vmatmul.mubr.f32.gmra.mrb[0].mxu0 %v493
        %v561 = vpop.f32.mrb[0].mxu0
        %v562 = vadd.f32 %v488, %v561
        %v563 = vpop.f32.mrb[0].mxu0
        %v564 = vadd.f32 %v490, %v563
        %565 = vdwg.mxu0
        %566 = vrot.lane.b32.xlu0 %v301, 113
        %v567 = vpop.permute.xlu0 %566
        %568 = vrot.lane.b32.xlu0 %v302, 113
        %v569 = vpop.permute.xlu0 %568
        %vm570 = vcmp.lt.s32.totalorder %v308, 113
        %v571 = vsel %vm570, %v567, %v569
        %v572 = vsel %vm570, %v569, %v567
        %s573 = scalar_lea.vmem [#allocation5], 6
        %v574 = vld [vmem:[%s573] ss:$8 sm:$0x3]
        %v576 = vlaneseq
        %v577 = vshrl.u32 %v576, 7
        %v578 = vsub.s32 0, %v577
        %v579 = vrot.slane %v574, %v578
        %v580 = vlaneseq
        %v581 = vshrl.u32 %v580, 7
        %v582 = vsub.s32 1, %v581
        %v583 = vrot.slane %v574, %v582
        %v586 = vmul.f32 %v571, %v579
        %v587 = vmul.f32 %v572, %v583
        %588 = vrot.lane.b32.xlu0 %v301, 112
        %v589 = vpop.permute.xlu0 %588
        %590 = vrot.lane.b32.xlu0 %v302, 112
        %v591 = vpop.permute.xlu0 %590
        %vm592 = vcmp.lt.s32.totalorder %v308, 112
        %v593 = vsel %vm592, %v589, %v591
        %v594 = vsel %vm592, %v591, %v589
        %s595 = scalar_lea.vmem [#allocation5], 7
        %v596 = vld [vmem:[%s595] ss:$8 sm:$0x3]
        %v598 = vlaneseq
        %v599 = vshrl.u32 %v598, 7
        %v600 = vsub.s32 0, %v599
        %v601 = vrot.slane %v596, %v600
        %v602 = vlaneseq
        %v603 = vshrl.u32 %v602, 7
        %v604 = vsub.s32 1, %v603
        %v605 = vrot.slane %v596, %v604
        %v608 = vmul.f32 %v593, %v601
        %v609 = vmul.f32 %v594, %v605
        %610 = vrot.lane.b32.xlu0 %v301, 111
        %v611 = vpop.permute.xlu0 %610
        %612 = vrot.lane.b32.xlu0 %v302, 111
        %v613 = vpop.permute.xlu0 %612
        %vm614 = vcmp.lt.s32.totalorder %v308, 111
        %v615 = vsel %vm614, %v611, %v613
        %v616 = vsel %vm614, %v613, %v611
        %s617 = scalar_lea.vmem [#allocation5], 16
        %v618 = vld [vmem:[%s617] ss:$8 sm:$0x3]
        %v620 = vlaneseq
        %v621 = vshrl.u32 %v620, 7
        %v622 = vsub.s32 0, %v621
        %v623 = vrot.slane %v618, %v622
        %v624 = vlaneseq
        %v625 = vshrl.u32 %v624, 7
        %v626 = vsub.s32 1, %v625
        %v627 = vrot.slane %v618, %v626
        %v630 = vmul.f32 %v615, %v623
        %v631 = vmul.f32 %v616, %v627
        %s632 = scalar_lea.vmem %s2, 16
        %v633 = vld [vmem:[%s632] sm:$0xff]
        %v635 = vsel %vm417, %v633, 0
        %637 = vmatprep.subr.mxu0 %v587
        %638 = vmatpush1.msra.mxu0 %v586
        %639 = vmatprep.subr.mxu0 %v609
        %640 = vmatpush1.msra.mxu0 %v608
        %641 = vmatprep.subr.mxu0 %v631
        %642 = vmatpush1.msra.mxu0 %v630
        %643 = vmatprep.subr.mxu0 0.0
        %644 = vmatpush1.msra.mxu0 0.0
        %645 = vmatprep.subr.mxu0 0.0
        %646 = vmatpush1.msra.mxu0 0.0
        %647 = vmatprep.subr.mxu0 0.0
        %648 = vmatpush1.msra.mxu0 0.0
        %649 = vmatprep.subr.mxu0 0.0
        %650 = vmatpush1.msra.mxu0 0.0
        %651 = vmatprep.subr.mxu0 0.0
        %652 = vmatpush1.msra.mxu0 0.0
        %653 = vmatprep.subr.mxu0 0.0
        %654 = vmatpush1.msra.mxu0 0.0
        %655 = vmatprep.subr.mxu0 0.0
        %656 = vmatpush1.msra.mxu0 0.0
        %657 = vmatprep.subr.mxu0 0.0
        %658 = vmatpush1.msra.mxu0 0.0
        %659 = vmatprep.subr.mxu0 0.0
        %660 = vmatpush1.msra.mxu0 0.0
        %661 = vmatprep.subr.mxu0 0.0
        %662 = vmatpush1.msra.mxu0 0.0
        %663 = vmatprep.subr.mxu0 0.0
        %664 = vmatpush1.msra.mxu0 0.0
        %665 = vmatprep.subr.mxu0 0.0
        %666 = vmatpush1.msra.mxu0 0.0
        %667 = vmatprep.subr.mxu0 0.0
        %668 = vmatpush1.msra.mxu0 0.0
        %669 = vmatprep.subr.mxu0 0.0
        %670 = vmatpush1.msra.mxu0 0.0
        %671 = vmatprep.subr.mxu0 0.0
        %672 = vmatpush1.msra.mxu0 0.0
        %673 = vmatprep.subr.mxu0 0.0
        %674 = vmatpush1.msra.mxu0 0.0
        %675 = vmatprep.subr.mxu0 0.0
        %676 = vmatpush1.msra.mxu0 0.0
        %677 = vmatprep.subr.mxu0 0.0
        %678 = vmatpush1.msra.mxu0 0.0
        %679 = vmatprep.subr.mxu0 0.0
        %680 = vmatpush1.msra.mxu0 0.0
        %681 = vmatprep.subr.mxu0 0.0
        %682 = vmatpush1.msra.mxu0 0.0
        %683 = vmatprep.subr.mxu0 0.0
        %684 = vmatpush1.msra.mxu0 0.0
        %685 = vmatprep.subr.mxu0 0.0
        %686 = vmatpush1.msra.mxu0 0.0
        %687 = vmatprep.subr.mxu0 0.0
        %688 = vmatpush1.msra.mxu0 0.0
        %689 = vmatprep.subr.mxu0 0.0
        %690 = vmatpush1.msra.mxu0 0.0
        %691 = vmatprep.subr.mxu0 0.0
        %692 = vmatpush1.msra.mxu0 0.0
        %693 = vmatprep.subr.mxu0 0.0
        %694 = vmatpush1.msra.mxu0 0.0
        %695 = vmatprep.subr.mxu0 0.0
        %696 = vmatpush1.msra.mxu0 0.0
        %697 = vmatprep.subr.mxu0 0.0
        %698 = vmatpush1.msra.mxu0 0.0
        %699 = vmatprep.subr.mxu0 0.0
        %700 = vmatpush1.msra.mxu0 0.0
        %701 = vmatprep.mubr.f32.mxu0 0.0
        %702 = vmatmul.mubr.f32.gmra.mrb[0].mxu0 %v635
        %v703 = vpop.f32.mrb[0].mxu0
        %v704 = vadd.f32 0.0, %v703
        %v705 = vpop.f32.mrb[0].mxu0
        %v706 = vadd.f32 0.0, %v705
        %707 = vdwg.mxu0
        %v708 = vadd.f32 %v562, %v704
        %v709 = vadd.f32 %v564, %v706
        %v710 = vld [vmem:[%s3] sm:$0xff]
        %712 = vset.pattern.permute.xlu0 0
        %713 = vperm.xlu0 %712, %v710
        %v714 = vpop.permute.xlu0 %713
        %v716 = vadd.f32 %v708, %v714
        %v717 = vadd.f32 %v709, %v714
        %v718 = vmax.f32 %v716, 0.0
        %v719 = vmax.f32 %v717, 0.0
        %720 = vrot.lane.b32.xlu0 %v718, 17
        %v721 = vpop.permute.xlu0 %720
        %722 = vrot.lane.b32.xlu0 %v719, 17
        %v723 = vpop.permute.xlu0 %722
        %v724 = vsel %vm309, %v721, %v723
        %v725 = vsel %vm309, %v723, %v721
        %v726 = vmul.f32 %v725, %v317
        %v727 = vmul.f32 %v724, %v321
        %728 = vrot.lane.b32.xlu0 %v718, 16
        %v729 = vpop.permute.xlu0 %728
        %730 = vrot.lane.b32.xlu0 %v719, 16
        %v731 = vpop.permute.xlu0 %730
        %v732 = vsel %vm330, %v729, %v731
        %v733 = vsel %vm330, %v731, %v729
        %v734 = vmul.f32 %v733, %v339
        %v735 = vmul.f32 %v732, %v343
        %736 = vrot.lane.b32.xlu0 %v718, 15
        %v737 = vpop.permute.xlu0 %736
        %738 = vrot.lane.b32.xlu0 %v719, 15
        %v739 = vpop.permute.xlu0 %738
        %v740 = vsel %vm352, %v737, %v739
        %v741 = vsel %vm352, %v739, %v737
        %v742 = vmul.f32 %v741, %v361
        %v743 = vmul.f32 %v740, %v365
        %v744 = vld [vmem:[#allocation7] sm:$0xff]
        %745 = vrot.lane.b32.xlu0 %v718, 1
        %v746 = vpop.permute.xlu0 %745
        %747 = vrot.lane.b32.xlu0 %v719, 1
        %v748 = vpop.permute.xlu0 %747
        %v749 = vsel %vm375, %v746, %v748
        %v750 = vsel %vm375, %v748, %v746
        %v751 = vmul.f32 %v750, %v384
        %v752 = vmul.f32 %v749, %v388
        %753 = vrot.lane.b32.xlu0 %v718, 127
        %v754 = vpop.permute.xlu0 %753
        %755 = vrot.lane.b32.xlu0 %v719, 127
        %v756 = vpop.permute.xlu0 %755
        %v757 = vsel %vm397, %v754, %v756
        %v758 = vsel %vm397, %v756, %v754
        %v759 = vmul.f32 %v757, %v406
        %v760 = vmul.f32 %v758, %v410
        %s761 = scalar_lea.vmem [#allocation7], 8
        %v762 = vld [vmem:[%s761] sm:$0xff]
        %v764 = vsel %vm417, %v762, 0
        %766 = vmatprep.subr.mxu0 %v752
        %767 = vmatpush1.msra.mxu0 %v751
        %768 = vmatprep.subr.mxu0 %v719
        %769 = vmatpush1.msra.mxu0 %v718
        %770 = vmatprep.subr.mxu0 %v760
        %771 = vmatpush1.msra.mxu0 %v759
        %772 = vmatprep.subr.mxu0 0.0
        %773 = vmatpush1.msra.mxu0 0.0
        %774 = vmatprep.subr.mxu0 0.0
        %775 = vmatpush1.msra.mxu0 0.0
        %776 = vmatprep.subr.mxu0 0.0
        %777 = vmatpush1.msra.mxu0 0.0
        %778 = vmatprep.subr.mxu0 0.0
        %779 = vmatpush1.msra.mxu0 0.0
        %780 = vmatprep.subr.mxu0 0.0
        %781 = vmatpush1.msra.mxu0 0.0
        %782 = vmatprep.subr.mxu0 0.0
        %783 = vmatpush1.msra.mxu0 0.0
        %784 = vmatprep.subr.mxu0 0.0
        %785 = vmatpush1.msra.mxu0 0.0
        %786 = vmatprep.subr.mxu0 0.0
        %787 = vmatpush1.msra.mxu0 0.0
        %788 = vmatprep.subr.mxu0 0.0
        %789 = vmatpush1.msra.mxu0 0.0
        %790 = vmatprep.subr.mxu0 0.0
        %791 = vmatpush1.msra.mxu0 0.0
        %792 = vmatprep.subr.mxu0 0.0
        %793 = vmatpush1.msra.mxu0 0.0
        %794 = vmatprep.subr.mxu0 0.0
        %795 = vmatpush1.msra.mxu0 0.0
        %796 = vmatprep.subr.mxu0 0.0
        %797 = vmatpush1.msra.mxu0 0.0
        %798 = vmatprep.subr.mxu0 0.0
        %799 = vmatpush1.msra.mxu0 0.0
        %800 = vmatprep.subr.mxu0 0.0
        %801 = vmatpush1.msra.mxu0 0.0
        %802 = vmatprep.subr.mxu0 0.0
        %803 = vmatpush1.msra.mxu0 0.0
        %804 = vmatprep.subr.mxu0 0.0
        %805 = vmatpush1.msra.mxu0 0.0
        %806 = vmatprep.subr.mxu0 0.0
        %807 = vmatpush1.msra.mxu0 0.0
        %808 = vmatprep.subr.mxu0 0.0
        %809 = vmatpush1.msra.mxu0 0.0
        %810 = vmatprep.subr.mxu0 0.0
        %811 = vmatpush1.msra.mxu0 0.0
        %812 = vmatprep.subr.mxu0 0.0
        %813 = vmatpush1.msra.mxu0 0.0
        %814 = vmatprep.subr.mxu0 0.0
        %815 = vmatpush1.msra.mxu0 0.0
        %816 = vmatprep.subr.mxu0 0.0
        %817 = vmatpush1.msra.mxu0 0.0
        %818 = vmatprep.subr.mxu0 0.0
        %819 = vmatpush1.msra.mxu0 0.0
        %820 = vmatprep.subr.mxu0 0.0
        %821 = vmatpush1.msra.mxu0 0.0
        %822 = vmatprep.subr.mxu0 0.0
        %823 = vmatpush1.msra.mxu0 0.0
        %824 = vmatprep.subr.mxu0 0.0
        %825 = vmatpush1.msra.mxu0 0.0
        %826 = vmatprep.subr.mxu0 0.0
        %827 = vmatpush1.msra.mxu0 0.0
        %828 = vmatprep.subr.mxu0 0.0
        %829 = vmatpush1.msra.mxu0 0.0
        %830 = vmatprep.mubr.f32.mxu0 0.0
        %831 = vmatmul.mubr.f32.gmra.mrb[0].mxu0 %v764
        %v832 = vpop.f32.mrb[0].mxu0
        %v833 = vadd.f32 0.0, %v832
        %v834 = vpop.f32.mrb[0].mxu0
        %v835 = vadd.f32 0.0, %v834
        %836 = vdwg.mxu0
        %v838 = vsel %vm417, %v744, 0
        %840 = vmatprep.subr.mxu0 %v727
        %841 = vmatpush1.msra.mxu0 %v726
        %842 = vmatprep.subr.mxu0 %v735
        %843 = vmatpush1.msra.mxu0 %v734
        %844 = vmatprep.subr.mxu0 %v743
        %845 = vmatpush1.msra.mxu0 %v742
        %846 = vmatprep.subr.mxu0 0.0
        %847 = vmatpush1.msra.mxu0 0.0
        %848 = vmatprep.subr.mxu0 0.0
        %849 = vmatpush1.msra.mxu0 0.0
        %850 = vmatprep.subr.mxu0 0.0
        %851 = vmatpush1.msra.mxu0 0.0
        %852 = vmatprep.subr.mxu0 0.0
        %853 = vmatpush1.msra.mxu0 0.0
        %854 = vmatprep.subr.mxu0 0.0
        %855 = vmatpush1.msra.mxu0 0.0
        %856 = vmatprep.subr.mxu0 0.0
        %857 = vmatpush1.msra.mxu0 0.0
        %858 = vmatprep.subr.mxu0 0.0
        %859 = vmatpush1.msra.mxu0 0.0
        %860 = vmatprep.subr.mxu0 0.0
        %861 = vmatpush1.msra.mxu0 0.0
        %862 = vmatprep.subr.mxu0 0.0
        %863 = vmatpush1.msra.mxu0 0.0
        %864 = vmatprep.subr.mxu0 0.0
        %865 = vmatpush1.msra.mxu0 0.0
        %866 = vmatprep.subr.mxu0 0.0
        %867 = vmatpush1.msra.mxu0 0.0
        %868 = vmatprep.subr.mxu0 0.0
        %869 = vmatpush1.msra.mxu0 0.0
        %870 = vmatprep.subr.mxu0 0.0
        %871 = vmatpush1.msra.mxu0 0.0
        %872 = vmatprep.subr.mxu0 0.0
        %873 = vmatpush1.msra.mxu0 0.0
        %874 = vmatprep.subr.mxu0 0.0
        %875 = vmatpush1.msra.mxu0 0.0
        %876 = vmatprep.subr.mxu0 0.0
        %877 = vmatpush1.msra.mxu0 0.0
        %878 = vmatprep.subr.mxu0 0.0
        %879 = vmatpush1.msra.mxu0 0.0
        %880 = vmatprep.subr.mxu0 0.0
        %881 = vmatpush1.msra.mxu0 0.0
        %882 = vmatprep.subr.mxu0 0.0
        %883 = vmatpush1.msra.mxu0 0.0
        %884 = vmatprep.subr.mxu0 0.0
        %885 = vmatpush1.msra.mxu0 0.0
        %886 = vmatprep.subr.mxu0 0.0
        %887 = vmatpush1.msra.mxu0 0.0
        %888 = vmatprep.subr.mxu0 0.0
        %889 = vmatpush1.msra.mxu0 0.0
        %890 = vmatprep.subr.mxu0 0.0
        %891 = vmatpush1.msra.mxu0 0.0
        %892 = vmatprep.subr.mxu0 0.0
        %893 = vmatpush1.msra.mxu0 0.0
        %894 = vmatprep.subr.mxu0 0.0
        %895 = vmatpush1.msra.mxu0 0.0
        %896 = vmatprep.subr.mxu0 0.0
        %897 = vmatpush1.msra.mxu0 0.0
        %898 = vmatprep.subr.mxu0 0.0
        %899 = vmatpush1.msra.mxu0 0.0
        %900 = vmatprep.subr.mxu0 0.0
        %901 = vmatpush1.msra.mxu0 0.0
        %902 = vmatprep.subr.mxu0 0.0
        %903 = vmatpush1.msra.mxu0 0.0
        %904 = vmatprep.mubr.f32.mxu0 0.0
        %905 = vmatmul.mubr.f32.gmra.mrb[0].mxu0 %v838
        %v906 = vpop.f32.mrb[0].mxu0
        %v907 = vadd.f32 %v833, %v906
        %v908 = vpop.f32.mrb[0].mxu0
        %v909 = vadd.f32 %v835, %v908
        %910 = vdwg.mxu0
        %911 = vrot.lane.b32.xlu0 %v718, 113
        %v912 = vpop.permute.xlu0 %911
        %913 = vrot.lane.b32.xlu0 %v719, 113
        %v914 = vpop.permute.xlu0 %913
        %v915 = vsel %vm570, %v912, %v914
        %v916 = vsel %vm570, %v914, %v912
        %v917 = vmul.f32 %v915, %v579
        %v918 = vmul.f32 %v916, %v583
        %919 = vrot.lane.b32.xlu0 %v718, 112
        %v920 = vpop.permute.xlu0 %919
        %921 = vrot.lane.b32.xlu0 %v719, 112
        %v922 = vpop.permute.xlu0 %921
        %v923 = vsel %vm592, %v920, %v922
        %v924 = vsel %vm592, %v922, %v920
        %v925 = vmul.f32 %v923, %v601
        %v926 = vmul.f32 %v924, %v605
        %927 = vrot.lane.b32.xlu0 %v718, 111
        %v928 = vpop.permute.xlu0 %927
        %929 = vrot.lane.b32.xlu0 %v719, 111
        %v930 = vpop.permute.xlu0 %929
        %v931 = vsel %vm614, %v928, %v930
        %v932 = vsel %vm614, %v930, %v928
        %v933 = vmul.f32 %v931, %v623
        %v934 = vmul.f32 %v932, %v627
        %s935 = scalar_lea.vmem [#allocation7], 16
        %v936 = vld [vmem:[%s935] sm:$0xff]
        %v938 = vsel %vm417, %v936, 0
        %940 = vmatprep.subr.mxu0 %v918
        %941 = vmatpush1.msra.mxu0 %v917
        %942 = vmatprep.subr.mxu0 %v926
        %943 = vmatpush1.msra.mxu0 %v925
        %944 = vmatprep.subr.mxu0 %v934
        %945 = vmatpush1.msra.mxu0 %v933
        %946 = vmatprep.subr.mxu0 0.0
        %947 = vmatpush1.msra.mxu0 0.0
        %948 = vmatprep.subr.mxu0 0.0
        %949 = vmatpush1.msra.mxu0 0.0
        %950 = vmatprep.subr.mxu0 0.0
        %951 = vmatpush1.msra.mxu0 0.0
        %952 = vmatprep.subr.mxu0 0.0
        %953 = vmatpush1.msra.mxu0 0.0
        %954 = vmatprep.subr.mxu0 0.0
        %955 = vmatpush1.msra.mxu0 0.0
        %956 = vmatprep.subr.mxu0 0.0
        %957 = vmatpush1.msra.mxu0 0.0
        %958 = vmatprep.subr.mxu0 0.0
        %959 = vmatpush1.msra.mxu0 0.0
        %960 = vmatprep.subr.mxu0 0.0
        %961 = vmatpush1.msra.mxu0 0.0
        %962 = vmatprep.subr.mxu0 0.0
        %963 = vmatpush1.msra.mxu0 0.0
        %964 = vmatprep.subr.mxu0 0.0
        %965 = vmatpush1.msra.mxu0 0.0
        %966 = vmatprep.subr.mxu0 0.0
        %967 = vmatpush1.msra.mxu0 0.0
        %968 = vmatprep.subr.mxu0 0.0
        %969 = vmatpush1.msra.mxu0 0.0
        %970 = vmatprep.subr.mxu0 0.0
        %971 = vmatpush1.msra.mxu0 0.0
        %972 = vmatprep.subr.mxu0 0.0
        %973 = vmatpush1.msra.mxu0 0.0
        %974 = vmatprep.subr.mxu0 0.0
        %975 = vmatpush1.msra.mxu0 0.0
        %976 = vmatprep.subr.mxu0 0.0
        %977 = vmatpush1.msra.mxu0 0.0
        %978 = vmatprep.subr.mxu0 0.0
        %979 = vmatpush1.msra.mxu0 0.0
        %980 = vmatprep.subr.mxu0 0.0
        %981 = vmatpush1.msra.mxu0 0.0
        %982 = vmatprep.subr.mxu0 0.0
        %983 = vmatpush1.msra.mxu0 0.0
        %984 = vmatprep.subr.mxu0 0.0
        %985 = vmatpush1.msra.mxu0 0.0
        %986 = vmatprep.subr.mxu0 0.0
        %987 = vmatpush1.msra.mxu0 0.0
        %988 = vmatprep.subr.mxu0 0.0
        %989 = vmatpush1.msra.mxu0 0.0
        %990 = vmatprep.subr.mxu0 0.0
        %991 = vmatpush1.msra.mxu0 0.0
        %992 = vmatprep.subr.mxu0 0.0
        %993 = vmatpush1.msra.mxu0 0.0
        %994 = vmatprep.subr.mxu0 0.0
        %995 = vmatpush1.msra.mxu0 0.0
        %996 = vmatprep.subr.mxu0 0.0
        %997 = vmatpush1.msra.mxu0 0.0
        %998 = vmatprep.subr.mxu0 0.0
        %999 = vmatpush1.msra.mxu0 0.0
        %1000 = vmatprep.subr.mxu0 0.0
        %1001 = vmatpush1.msra.mxu0 0.0
        %1002 = vmatprep.subr.mxu0 0.0
        %1003 = vmatpush1.msra.mxu0 0.0
        %1004 = vmatprep.mubr.f32.mxu0 0.0
        %1005 = vmatmul.mubr.f32.gmra.mrb[0].mxu0 %v938
        %v1006 = vpop.f32.mrb[0].mxu0
        %v1007 = vadd.f32 0.0, %v1006
        %v1008 = vpop.f32.mrb[0].mxu0
        %v1009 = vadd.f32 0.0, %v1008
        %1010 = vdwg.mxu0
        %v1011 = vadd.f32 %v907, %v1007
        %v1012 = vadd.f32 %v909, %v1009
        %v1013 = vld [vmem:[%s5] sm:$0xff]
        %1015 = vset.pattern.permute.xlu0 0
        %1016 = vperm.xlu0 %1015, %v1013
        %v1017 = vpop.permute.xlu0 %1016
        %v1019 = vadd.f32 %v1011, %v1017
        %v1020 = vadd.f32 %v1012, %v1017
        %v1021 = vadd.f32 %v1019, %v299
        %v1022 = vadd.f32 %v1020, %v300
        %1023 = vst [vmem:[%s296] sm:$0xff] %v1021
        %1024 = vst [vmem:[%s296 + $0x8] sm:$0xff] %v1022
        %s1025 = sand.u32 %s163, 1
        %s1026 = scalar_lea.sflag [#allocation4], %s1025
        %s1027 = sand.u32 %s163, 1
        %s1028 = smul.addr %s1027, 16
        %s1029 = scalar_lea.vmem [#allocation8], %s1028
        // Predicated region
        $region57: #{tpu_custom_call.1} parent=43 // pred_check
          %p1030 = pneg %p173
        $region58: #{tpu_custom_call.1} parent=43 // pred_check_branch
          %1032 = sbr.rel (%p1030) target = $region60
        $region59: #{tpu_custom_call.1} parent=43 // pred_region
          %s1033 = smul.u32 2, %s24
          %s1035 = ssub.s32 256, 256
          %1036 = vsyncadd %s1026, %s1035
          %s1037 = smul.addr %s1033, 128
          %s1038 = scalar_lea.hbm %s6, %s1037
          %s1040 = sshll.u32 %s1029, 4
          %s1041 = int_to_ptr.vmem [resolvable:$true] %s1040
          %1043 = dma.vmem_to_hbm [thread:$0]  %s1041, 256, %s1038, %s1026
        $region60: #{tpu_custom_call.1} parent=43 // pred_fallthru
          _
      $region44: #{tpu_custom_call.1} parent=5 // pred_fallthru
        _
      %p1044 = scmp.le.s32.totalorder 2, %s19
      // Predicated region
      $region61: #{tpu_custom_call.1} parent=5 // pred_check
        %p1045 = pneg %p1044
      $region62: #{tpu_custom_call.1} parent=5 // pred_check_branch
        %1047 = sbr.rel (%p1045) target = $region64
      $region63: #{tpu_custom_call.1} parent=5 // pred_region
        %s1048 = ssub.s32 %s19, 2
        // Predicated region
        $region65: #{tpu_custom_call.1} parent=63 // pred_check
          %p1049 = pneg %p179
        $region66: #{tpu_custom_call.1} parent=63 // pred_check_branch
          %1051 = sbr.rel (%p1049) target = $region68
        $region67: #{tpu_custom_call.1} parent=63 // pred_region
          %s1052 = sand.u32 %s164, 1
          %s1053 = scalar_lea.sflag [#allocation4], %s1052
          %s1054 = sand.u32 %s164, 1
          %s1055 = smul.addr %s1054, 16
          %s1056 = scalar_lea.vmem [#allocation8], %s1055
          %1057 = dma.done %s1053, 256
        $region68: #{tpu_custom_call.1} parent=63 // pred_fallthru
          _
      $region64: #{tpu_custom_call.1} parent=5 // pred_fallthru
        _
    $region6: #{tpu_custom_call.1} parent=1 // loop_footer
      %s23 = sadd.s32 1, %s19
    $region7: #{tpu_custom_call.1} parent=1 // loop_footer_branch
      %18 = sbr.rel target = $region3
    $region8: #{tpu_custom_call.1} parent=1 // loop_exit
      _
    %1058 = vsyncpa [#allocation3], 1
    %s1059 = scalar_lea.sflag [#allocation3], 1
    %1060 = vsyncpa %s1059, 1
    %1061 = vsyncpa [#allocation6], 1
    %1062 = vsyncpa [#allocation4], 1
    %s1063 = scalar_lea.sflag [#allocation4], 1
    %1064 = vsyncpa %s1063, 1

</llo_original>
